<compile_context>
chip_gen: v5e
topology: v5e:2x2
jax: 0.10.0
libtpu: 0.0.40
codegen_flags: <defaults>
</compile_context>

<pallas_src>
import functools

import jax
import jax.numpy as jnp
from jax.experimental import pallas as pl
from jax.experimental.pallas import tpu as pltpu

_LANE = 128


def _cdiv(a, b):
    return -(-a // b)


def _round_up(n, m):
    return _cdiv(n, m) * m


def _apply_act(h, nonlinear):
    if nonlinear == "relu":
        return jnp.maximum(h, 0.0)
    if nonlinear == "tanh":
        return jnp.tanh(h)
    return h


def _mlp_softmax_kernel(x_ref, *refs, hidden_layer, nonlinear, d_out, compute_dtype):
    # refs layout:
    #   hidden_layer=True : w_in, b_in, w_h, b_h, w_out, b_out, o_ref
    #   hidden_layer=False: w_in, b_in,             w_out, b_out, o_ref
    if hidden_layer:
        w_in_ref, b_in_ref, w_h_ref, b_h_ref, w_out_ref, b_out_ref, o_ref = refs
    else:
        w_in_ref, b_in_ref, w_out_ref, b_out_ref, o_ref = refs

    x = x_ref[...]  # already cast to compute_dtype by the wrapper

    # input linear (+ activation); f32 accumulation on the MXU
    h = jnp.dot(x, w_in_ref[...], preferred_element_type=jnp.float32) + b_in_ref[...]
    h = _apply_act(h, nonlinear)

    # optional hidden linear (static Python flag -> no dead refs when False)
    if hidden_layer:
        h = jnp.dot(h.astype(compute_dtype), w_h_ref[...],
                    preferred_element_type=jnp.float32) + b_h_ref[...]
    # Faithful to the PyTorch forward: the activation is applied again here,
    # i.e. act(act(.)) when hidden_layer=False (idempotent for relu, not tanh).
    h = _apply_act(h, nonlinear)

    # output linear; padded columns have zero weights/bias -> logit exactly 0
    logits = jnp.dot(h.astype(compute_dtype), w_out_ref[...],
                     preferred_element_type=jnp.float32) + b_out_ref[...]

    # numerically stable softmax over the padded feature axis (f32 throughout).
    # Padded lanes are killed AFTER the exp so they add nothing to the sum.
    m = jnp.max(logits, axis=1, keepdims=True)
    e = jnp.exp(logits - m)
    d_out_p = logits.shape[1]
    if d_out_p != d_out:
        lane = jax.lax.broadcasted_iota(jnp.int32, (1, d_out_p), 1)
        e = jnp.where(lane < d_out, e, 0.0)
    denom = jnp.sum(e, axis=1, keepdims=True)
    # exact reciprocal: approx EUP reciprocal's error breaks tight row-sum checks
    o_ref[...] = (e * (1.0 / denom)).astype(o_ref.dtype)


def prepare_params(params, *, hidden_layer, compute_dtype=jnp.bfloat16):
    """One-time parameter prep (hoisted out of the per-call forward).

    Pads every feature dim up to a 128-lane multiple and casts the matmul
    operands to compute_dtype (bf16 by default: native MXU dtype on v5e/v6e/
    v7x, f32 accumulation kept in-kernel).  Biases stay f32.
    """
    w_in, b_in, w_h, b_h, w_out, b_out = params
    d_in, d_ins = w_in.shape
    d_out = w_out.shape[1]
    d_in_p = _round_up(d_in, _LANE)
    d_ins_p = _round_up(d_ins, _LANE)
    d_out_p = _round_up(d_out, _LANE)

    def pad2(a, rows, cols, dt):
        a = jnp.asarray(a).astype(dt)
        if a.shape == (rows, cols):
            return a                      # aligned fast path: no extra copy
        return jnp.zeros((rows, cols), dt).at[:a.shape[0], :a.shape[1]].set(a)

    prepped = {
        "dims": (d_in, d_ins, d_out, d_in_p, d_ins_p, d_out_p),
        "hidden_layer": bool(hidden_layer),
        "compute_dtype": jnp.dtype(compute_dtype),
        "w_in": pad2(w_in, d_in_p, d_ins_p, compute_dtype),
        "b_in": pad2(b_in, 1, d_ins_p, jnp.float32),
        "w_out": pad2(w_out, d_ins_p, d_out_p, compute_dtype),
        "b_out": pad2(b_out, 1, d_out_p, jnp.float32),
    }
    if hidden_layer:
        prepped["w_h"] = pad2(w_h, d_ins_p, d_ins_p, compute_dtype)
        prepped["b_h"] = pad2(b_h, 1, d_ins_p, jnp.float32)
    return prepped


def model_forward(x, prepped, *, nonlinear, batch_tile=None):
    """Pallas forward pass matching the PyTorch Model.forward semantics."""
    hidden_layer = prepped["hidden_layer"]
    compute_dtype = prepped["compute_dtype"]
    d_in, d_ins, d_out, d_in_p, d_ins_p, d_out_p = prepped["dims"]
    B = x.shape[0]
    assert x.shape[1] == d_in, "input feature dim mismatch"

    sub = 16 if compute_dtype == jnp.dtype(jnp.bfloat16) else 8
    itemsize = compute_dtype.itemsize

    # ---- VMEM accounting (weights resident + double-buffered by the pipeline,
    # f32 activation temps per batch row) -> batch_tile + vmem_limit. ----
    w_elems = d_in_p * d_ins_p + (d_ins_p * d_ins_p if hidden_layer else 0) + d_ins_p * d_out_p
    w_bytes = 2 * w_elems * itemsize + 2 * (2 * d_ins_p + 2 * d_out_p) * 4
    row_bytes = (2 * d_in_p * itemsize          # x tile, double-buffered
                 + 2 * d_out_p * 4              # out tile, double-buffered
                 + (2 * d_ins_p + 2 * d_out_p) * 4)  # h / logits / exp temps (f32)

    if batch_tile is None:
        budget = 12 * 1024 * 1024  # conservative: fits v5e 16MiB scoped / v7x 64MiB
        rows = max(sub, (budget - w_bytes) // max(row_bytes, 1))
        # >= 2 grid steps whenever possible so v7x's two TensorCores both get work
        target = _round_up(_cdiv(B, 2), sub)
        batch_tile = max(sub, min(int(rows), target, 2048))
    batch_tile = _round_up(max(sub, min(batch_tile, _round_up(B, sub))), sub)
    B_pad = _round_up(B, batch_tile)

    # pad + cast activations (skip the copy when already aligned and typed)
    if x.shape == (B_pad, d_in_p) and x.dtype == compute_dtype:
        x_p = x
    else:
        x_p = (jnp.zeros((B_pad, d_in_p), compute_dtype)
               .at[:B, :d_in].set(x.astype(compute_dtype)))

    rep = lambda i: (0, 0)  # weights / biases replicated across batch tiles

    operands = [x_p, prepped["w_in"], prepped["b_in"]]
    in_specs = [
        pl.BlockSpec((batch_tile, d_in_p), lambda i: (i, 0)),
        pl.BlockSpec((d_in_p, d_ins_p), rep),
        pl.BlockSpec((1, d_ins_p), rep),
    ]
    if hidden_layer:
        operands += [prepped["w_h"], prepped["b_h"]]
        in_specs += [pl.BlockSpec((d_ins_p, d_ins_p), rep),
                     pl.BlockSpec((1, d_ins_p), rep)]
    operands += [prepped["w_out"], prepped["b_out"]]
    in_specs += [pl.BlockSpec((d_ins_p, d_out_p), rep),
                 pl.BlockSpec((1, d_out_p), rep)]

    kernel = functools.partial(_mlp_softmax_kernel,
                               hidden_layer=hidden_layer,
                               nonlinear=nonlinear,
                               d_out=d_out,
                               compute_dtype=compute_dtype)

    vmem_need = w_bytes + batch_tile * row_bytes
    vmem_limit = int(min(100 * 2**20, max(32 * 2**20, 2 * vmem_need)))

    out_p = pl.pallas_call(
        kernel,
        out_shape=jax.ShapeDtypeStruct((B_pad, d_out_p), jnp.float32),
        grid_spec=pltpu.PrefetchScalarGridSpec(
            num_scalar_prefetch=0,
            grid=(B_pad // batch_tile,),
            in_specs=in_specs,
            out_specs=pl.BlockSpec((batch_tile, d_out_p), lambda i: (i, 0)),
        ),
        compiler_params=pltpu.CompilerParams(
            dimension_semantics=("parallel",),   # megacore-sharded on v7x
            vmem_limit_bytes=vmem_limit,
        ),
    )(*operands)

    # strip batch + lane padding
    return out_p[:B, :d_out]


def init_params(key, input_dims, output_dims, hidden_layer):
    inside_dims = (hidden_layer
                   if isinstance(hidden_layer, int) and not isinstance(hidden_layer, bool)
                   else (input_dims + output_dims) // 2)
    ks = jax.random.split(key, 6)
    scale = 0.1
    w_in = scale * jax.random.normal(ks[0], (input_dims, inside_dims), jnp.float32)
    b_in = scale * jax.random.normal(ks[1], (1, inside_dims), jnp.float32)
    w_h = scale * jax.random.normal(ks[2], (inside_dims, inside_dims), jnp.float32)
    b_h = scale * jax.random.normal(ks[3], (1, inside_dims), jnp.float32)
    w_out = scale * jax.random.normal(ks[4], (inside_dims, output_dims), jnp.float32)
    b_out = scale * jax.random.normal(ks[5], (1, output_dims), jnp.float32)
    return (w_in, b_in, w_h, b_h, w_out, b_out)


def reference_forward(x, params, *, hidden_layer, nonlinear):
    w_in, b_in, w_h, b_h, w_out, b_out = params
    hp = jax.lax.Precision.HIGHEST  # avoid TPU default bf16 matmul demotion in the reference

    def act(h):
        if nonlinear == "relu":
            return jnp.maximum(h, 0.0)
        if nonlinear == "tanh":
            return jnp.tanh(h)
        return h

    h = act(jnp.dot(x, w_in, precision=hp) + b_in)   # input linear + act
    if hidden_layer:
        h = jnp.dot(h, w_h, precision=hp) + b_h
    h = act(h)                                       # second act (matches PyTorch forward)
    logits = jnp.dot(h, w_out, precision=hp) + b_out
    return jax.nn.softmax(logits, axis=1)


def _check(name, x, params, *, hidden_layer, nonlinear, compute_dtype, atol):
    prepped = prepare_params(params, hidden_layer=hidden_layer, compute_dtype=compute_dtype)
    out = jax.block_until_ready(model_forward(x, prepped, nonlinear=nonlinear))
    ref = reference_forward(x, params, hidden_layer=hidden_layer, nonlinear=nonlinear)
    assert out.shape == ref.shape, f"{name}: shape mismatch {out.shape} vs {ref.shape}"
    assert bool(jnp.all(jnp.isfinite(out))), f"{name}: non-finite output"
    err = float(jnp.max(jnp.abs(out - ref)))
    assert jnp.allclose(out, ref, atol=atol, rtol=atol), f"{name}: mismatch vs reference (max err {err})"
    assert jnp.allclose(jnp.sum(out, axis=1), 1.0, atol=1e-3), f"{name}: rows must sum to 1"


if __name__ == "__main__":
    key = jax.random.PRNGKey(0)
    kx, kp = jax.random.split(key)

    input_dims, output_dims, batch = 32, 8, 16
    x = jax.random.normal(kx, (batch, input_dims), jnp.float32)
    params = init_params(kp, input_dims, output_dims, True)

    # f32 compute path (tolerance still robust to TPU MXU precision effects)
    _check("hidden+relu/f32", x, params, hidden_layer=True, nonlinear="relu",
           compute_dtype=jnp.float32, atol=3e-3)
    _check("nohidden+tanh/f32", x, params, hidden_layer=False, nonlinear="tanh",
           compute_dtype=jnp.float32, atol=3e-3)
    # default bf16 MXU path (looser tolerance vs the f32 reference)
    _check("hidden+relu/bf16", x, params, hidden_layer=True, nonlinear="relu",
           compute_dtype=jnp.bfloat16, atol=2e-2)

    print("KERNEL_OK")
</pallas_src>

<mosaic_0001>
module attributes {stable_mosaic.version = 11 : i64} {
  func.func @_mlp_softmax_kernel(%arg0: i32, %arg1: memref<8x128xf32, #tpu.memory_space<vmem>>, %arg2: memref<128x128xf32, #tpu.memory_space<vmem>>, %arg3: memref<1x128xf32, #tpu.memory_space<vmem>>, %arg4: memref<128x128xf32, #tpu.memory_space<vmem>>, %arg5: memref<1x128xf32, #tpu.memory_space<vmem>>, %arg6: memref<128x128xf32, #tpu.memory_space<vmem>>, %arg7: memref<1x128xf32, #tpu.memory_space<vmem>>, %arg8: memref<8x128xf32, #tpu.memory_space<vmem>>) attributes {dimension_semantics = [#tpu.dimension_semantics<parallel>], iteration_bounds = array<i64: 2>, scalar_prefetch = 0 : i64, scratch_operands = 0 : i64, tpu.core_type = #tpu.core_type<tc>, window_params = [{transform_indices = @transform_0, window_bounds = array<i64: 8, 128>}, {pipeline_mode = #tpu.pipeline_mode<synchronous>, transform_indices = @transform_1, window_bounds = array<i64: 128, 128>}, {pipeline_mode = #tpu.pipeline_mode<synchronous>, transform_indices = @transform_2, window_bounds = array<i64: 1, 128>}, {pipeline_mode = #tpu.pipeline_mode<synchronous>, transform_indices = @transform_3, window_bounds = array<i64: 128, 128>}, {pipeline_mode = #tpu.pipeline_mode<synchronous>, transform_indices = @transform_4, window_bounds = array<i64: 1, 128>}, {pipeline_mode = #tpu.pipeline_mode<synchronous>, transform_indices = @transform_5, window_bounds = array<i64: 128, 128>}, {pipeline_mode = #tpu.pipeline_mode<synchronous>, transform_indices = @transform_6, window_bounds = array<i64: 1, 128>}, {transform_indices = @transform_7, window_bounds = array<i64: 8, 128>}]} {
    %c0 = arith.constant 0 : index
    %c0_0 = arith.constant 0 : index
    %0 = vector.load %arg1[%c0, %c0_0] : memref<8x128xf32, #tpu.memory_space<vmem>>, vector<8x128xf32>
    %c0_1 = arith.constant 0 : index
    %c0_2 = arith.constant 0 : index
    %1 = vector.load %arg2[%c0_1, %c0_2] : memref<128x128xf32, #tpu.memory_space<vmem>>, vector<128x128xf32>
    %cst = arith.constant dense<0.000000e+00> : vector<8x128xf32>
    %2 = tpu.matmul %0, %1, %cst {dimension_numbers = #tpu.dot_dimension_numbers<[1], [0], [0], [1], [0, 0, 1, 1], [], []>} : vector<8x128xf32>, vector<128x128xf32>, vector<8x128xf32> -> vector<8x128xf32>
    %c0_3 = arith.constant 0 : index
    %c0_4 = arith.constant 0 : index
    %3 = vector.load %arg3[%c0_3, %c0_4] : memref<1x128xf32, #tpu.memory_space<vmem>>, vector<1x128xf32>
    %4 = vector.broadcast %3 : vector<1x128xf32> to vector<8x128xf32>
    %5 = arith.addf %2, %4 : vector<8x128xf32>
    %cst_5 = arith.constant 0.000000e+00 : f32
    %6 = vector.broadcast %cst_5 : f32 to vector<8x128xf32>
    %7 = arith.maximumf %5, %6 : vector<8x128xf32>
    %c0_6 = arith.constant 0 : index
    %c0_7 = arith.constant 0 : index
    %8 = vector.load %arg4[%c0_6, %c0_7] : memref<128x128xf32, #tpu.memory_space<vmem>>, vector<128x128xf32>
    %cst_8 = arith.constant dense<0.000000e+00> : vector<8x128xf32>
    %9 = tpu.matmul %7, %8, %cst_8 {dimension_numbers = #tpu.dot_dimension_numbers<[1], [0], [0], [1], [0, 0, 1, 1], [], []>} : vector<8x128xf32>, vector<128x128xf32>, vector<8x128xf32> -> vector<8x128xf32>
    %c0_9 = arith.constant 0 : index
    %c0_10 = arith.constant 0 : index
    %10 = vector.load %arg5[%c0_9, %c0_10] : memref<1x128xf32, #tpu.memory_space<vmem>>, vector<1x128xf32>
    %11 = vector.broadcast %10 : vector<1x128xf32> to vector<8x128xf32>
    %12 = arith.addf %9, %11 : vector<8x128xf32>
    %cst_11 = arith.constant 0.000000e+00 : f32
    %13 = vector.broadcast %cst_11 : f32 to vector<8x128xf32>
    %14 = arith.maximumf %12, %13 : vector<8x128xf32>
    %c0_12 = arith.constant 0 : index
    %c0_13 = arith.constant 0 : index
    %15 = vector.load %arg6[%c0_12, %c0_13] : memref<128x128xf32, #tpu.memory_space<vmem>>, vector<128x128xf32>
    %cst_14 = arith.constant dense<0.000000e+00> : vector<8x128xf32>
    %16 = tpu.matmul %14, %15, %cst_14 {dimension_numbers = #tpu.dot_dimension_numbers<[1], [0], [0], [1], [0, 0, 1, 1], [], []>} : vector<8x128xf32>, vector<128x128xf32>, vector<8x128xf32> -> vector<8x128xf32>
    %c0_15 = arith.constant 0 : index
    %c0_16 = arith.constant 0 : index
    %17 = vector.load %arg7[%c0_15, %c0_16] : memref<1x128xf32, #tpu.memory_space<vmem>>, vector<1x128xf32>
    %18 = vector.broadcast %17 : vector<1x128xf32> to vector<8x128xf32>
    %19 = arith.addf %16, %18 : vector<8x128xf32>
    %cst_17 = arith.constant dense<0xFF800000> : vector<8xf32>
    %20 = vector.multi_reduction <maximumf>, %19, %cst_17 [1] : vector<8x128xf32> to vector<8xf32>
    %21 = vector.shape_cast %20 : vector<8xf32> to vector<8x1xf32>
    %22 = vector.broadcast %21 : vector<8x1xf32> to vector<8x128xf32>
    %23 = arith.subf %19, %22 : vector<8x128xf32>
    %24 = math.exp %23 : vector<8x128xf32>
    %25 = tpu.iota {dimensions = array<i32: 1>} : vector<1x128xi32>
    %c8_i32 = arith.constant 8 : i32
    %26 = vector.broadcast %c8_i32 : i32 to vector<1x128xi32>
    %27 = arith.cmpi slt, %25, %26 : vector<1x128xi32>
    %cst_18 = arith.constant 0.000000e+00 : f32
    %28 = vector.shape_cast %27 : vector<1x128xi1> to vector<1x128xi1>
    %29 = vector.broadcast %28 : vector<1x128xi1> to vector<8x128xi1>
    %30 = vector.broadcast %cst_18 : f32 to vector<8x128xf32>
    %31 = arith.select %29, %24, %30 : vector<8x128xi1>, vector<8x128xf32>
    %cst_19 = arith.constant dense<0.000000e+00> : vector<8xf32>
    %32 = vector.multi_reduction <add>, %31, %cst_19 [1] : vector<8x128xf32> to vector<8xf32>
    %33 = vector.shape_cast %32 : vector<8xf32> to vector<8x1xf32>
    %cst_20 = arith.constant 1.000000e+00 : f32
    %34 = vector.broadcast %cst_20 : f32 to vector<8x1xf32>
    %35 = arith.divf %34, %33 : vector<8x1xf32>
    %36 = vector.broadcast %35 : vector<8x1xf32> to vector<8x128xf32>
    %37 = arith.mulf %31, %36 : vector<8x128xf32>
    %c0_21 = arith.constant 0 : index
    %c0_22 = arith.constant 0 : index
    %38 = vector.load %arg8[%c0_21, %c0_22] : memref<8x128xf32, #tpu.memory_space<vmem>>, vector<8x128xf32>
    tpu.vector_store %arg8[%c0_21, %c0_22], %37 {strides = array<i32>} : memref<8x128xf32, #tpu.memory_space<vmem>>, vector<8x128xf32>,
    return
  }
  func.func @transform_0(%arg0: i32) -> (i32, i32) {
    %c0_i32 = arith.constant 0 : i32
    %c0_i32_0 = arith.constant 0 : i32
    return %arg0, %c0_i32 : i32, i32
  }
  func.func @transform_1(%arg0: i32) -> (i32, i32) {
    %c0_i32 = arith.constant 0 : i32
    %c0_i32_0 = arith.constant 0 : i32
    %c0_i32_1 = arith.constant 0 : i32
    return %c0_i32, %c0_i32_0 : i32, i32
  }
  func.func @transform_2(%arg0: i32) -> (i32, i32) {
    %c0_i32 = arith.constant 0 : i32
    %c0_i32_0 = arith.constant 0 : i32
    %c0_i32_1 = arith.constant 0 : i32
    return %c0_i32, %c0_i32_0 : i32, i32
  }
  func.func @transform_3(%arg0: i32) -> (i32, i32) {
    %c0_i32 = arith.constant 0 : i32
    %c0_i32_0 = arith.constant 0 : i32
    %c0_i32_1 = arith.constant 0 : i32
    return %c0_i32, %c0_i32_0 : i32, i32
  }
  func.func @transform_4(%arg0: i32) -> (i32, i32) {
    %c0_i32 = arith.constant 0 : i32
    %c0_i32_0 = arith.constant 0 : i32
    %c0_i32_1 = arith.constant 0 : i32
    return %c0_i32, %c0_i32_0 : i32, i32
  }
  func.func @transform_5(%arg0: i32) -> (i32, i32) {
    %c0_i32 = arith.constant 0 : i32
    %c0_i32_0 = arith.constant 0 : i32
    %c0_i32_1 = arith.constant 0 : i32
    return %c0_i32, %c0_i32_0 : i32, i32
  }
  func.func @transform_6(%arg0: i32) -> (i32, i32) {
    %c0_i32 = arith.constant 0 : i32
    %c0_i32_0 = arith.constant 0 : i32
    %c0_i32_1 = arith.constant 0 : i32
    return %c0_i32, %c0_i32_0 : i32, i32
  }
  func.func @transform_7(%arg0: i32) -> (i32, i32) {
    %c0_i32 = arith.constant 0 : i32
    %c0_i32_0 = arith.constant 0 : i32
    return %arg0, %c0_i32 : i32, i32
  }
}

</mosaic_0001>

<llo_original>
// kernel: tpu_custom_call.1
$region0: #{tpu_custom_call.1}
  #allocation0 [shape = 'u32[]', space=smem, size = 0x4, offset = 0x4, fixed_abs, tag = 'smem constant byte address 0x4 - core index']
  #allocation1 [shape = 'u32[72,128]{1,0:T(1,128)}', space=vmem, size = 0x9000, scoped, tag = 'internal scratch']
  %s0 = inlined_call_operand.hbm [shape: f32[16,128], index: 0, kind: input, shape index: {}]
  %s1 = inlined_call_operand.hbm [shape: f32[128,128], index: 1, kind: input, shape index: {}]
  %s2 = inlined_call_operand.vmem [shape: f32[1,128], index: 2, kind: input, shape index: {}]
  %s3 = inlined_call_operand.hbm [shape: f32[128,128], index: 3, kind: input, shape index: {}]
  %s4 = inlined_call_operand.vmem [shape: f32[1,128], index: 4, kind: input, shape index: {}]
  %s5 = inlined_call_operand.hbm [shape: f32[128,128], index: 5, kind: input, shape index: {}]
  %s6 = inlined_call_operand.vmem [shape: f32[1,128], index: 6, kind: input, shape index: {}]
  %s7 = inlined_call_operand.hbm [shape: f32[16,128], index: 7, kind: output, shape index: {}]
  %s8 = sld [smem:[#allocation0]]
  $region77: #{tpu_custom_call.1} parent=0
    _
  %s10 = ssub.s32 1, %s8
  %s11 = scalar_select 0, %s10, %s8
  $region1: #{tpu_custom_call.1} parent=0
    #allocation2 [shape = 'u8[8192]{0}', space=vmem, size = 0x2000, scoped, tag = 'input window, operand 0']
    #allocation3 [shape = 's32[2]{0}', space=sflag, size = 0x8, scoped, tag = 'scoped memory for tpu_custom_call.1']
    #allocation4 [shape = 's32[2]{0}', space=sflag, size = 0x8, scoped, tag = 'scoped memory for tpu_custom_call.1']
    #allocation5 [shape = 'u8[65536]{0}', space=vmem, size = 0x10000, scoped, tag = 'input window, operand 1, single buffered']
    #allocation6 [shape = 's32[1]{0}', space=sflag, size = 0x4, scoped, tag = 'scoped memory for tpu_custom_call.1']
    #allocation7 [shape = 'u8[65536]{0}', space=vmem, size = 0x10000, scoped, tag = 'input window, operand 3, single buffered']
    #allocation8 [shape = 'u8[65536]{0}', space=vmem, size = 0x10000, scoped, tag = 'input window, operand 5, single buffered']
    #allocation9 [shape = 's32[1]{0}', space=sflag, size = 0x4, scoped, tag = 'scoped memory for tpu_custom_call.1']
    #allocation10 [shape = 'u8[8192]{0}', space=vmem, size = 0x2000, scoped, tag = 'output window, operand 0']
    %12 = vsyncpa [#allocation3], 0
    %s13 = scalar_lea.sflag [#allocation3], 1
    %14 = vsyncpa %s13, 0
    %15 = vsyncpa [#allocation6], 0
    %16 = vsyncpa [#allocation9], 0
    %17 = vsyncpa [#allocation4], 0
    %s18 = scalar_lea.sflag [#allocation4], 1
    %19 = vsyncpa %s18, 0
    loop: start=0, step=1, limit=4
    $region2: #{tpu_custom_call.1} parent=1 // loop_pre_header
      _
    $region3: #{tpu_custom_call.1} parent=1 // loop_header
      %s21 = sphi 0, %s25
      %p22 = scmp.ge.s32.totalorder %s21, 4
      %s31 = sphi 0, %s33
      %s34 = sphi 0, %s31
      %s35 = sphi 0, %s34
      %s51 = sphi 0, %s35
      %s55 = sphi 0, %s55
      %s57 = sphi 0, %s55
      %s58 = sphi 0, %s57
      %s72 = sphi 0, %s58
      %s76 = sphi 0, %s76
      %s78 = sphi 0, %s76
      %s79 = sphi 0, %s78
      %s93 = sphi 0, %s79
      %s97 = sphi 0, %s97
      %s99 = sphi 0, %s97
      %s100 = sphi 0, %s99
      %s114 = sphi 0, %s100
      %s118 = sphi 0, %s118
      %s120 = sphi 0, %s118
      %s121 = sphi 0, %s120
      %s135 = sphi 0, %s121
      %s139 = sphi 0, %s139
      %s141 = sphi 0, %s139
      %s142 = sphi 0, %s141
      %s156 = sphi 0, %s142
      %s160 = sphi 0, %s160
      %s162 = sphi 0, %s160
      %s163 = sphi 0, %s162
      %s177 = sphi 0, %s163
      %s183 = sphi 0, %s185
      %s186 = sphi 0, %s183
      %s187 = sphi 0, %s186
      %s203 = sphi 0, %s187
    $region4: #{tpu_custom_call.1} parent=1 // loop_header_branch
      %24 = sbr.rel (%p22) target = $region8
    $region5: #{tpu_custom_call.1} parent=1 // loop_body
      %s26 = ssub.s32 %s21, 1
      %s27 = ssub.s32 %s21, 2
      %s28 = sadd.s32 %s21, 1
      %s29 = ssub.s32 %s21, %s28
      %p30 = scmp.eq.s32.totalorder %s29, 0
      %s32 = sadd.s32 %s31, 1
      %s33 = scalar_select %p30, %s31, %s32
      %p36 = pneg %p30
      %p37 = scmp.eq.s32.totalorder %s21, 1
      %p38 = por %p36, %p37
      %p39 = scmp.ne.s32.totalorder %s31, %s34
      %p40 = scmp.eq.s32.totalorder %s21, 0
      %p41 = por %p39, %p40
      %p42 = scmp.ne.s32.totalorder %s31, %s34
      %p43 = scmp.eq.s32.totalorder %s26, 1
      %p44 = por %p42, %p43
      %p45 = scmp.ne.s32.totalorder %s34, %s35
      %p46 = scmp.eq.s32.totalorder %s26, 0
      %p47 = por %p45, %p46
      %p48 = scmp.ne.s32.totalorder %s34, %s35
      %p49 = scmp.eq.s32.totalorder %s27, 1
      %p50 = por %p48, %p49
      %p52 = scmp.ne.s32.totalorder %s35, %s51
      %p53 = scmp.eq.s32.totalorder %s27, 0
      %p54 = por %p52, %p53
      %s56 = sadd.s32 %s55, 1
      %p59 = scmp.eq.s32.totalorder %s21, 1
      %p60 = scmp.ne.s32.totalorder %s55, %s57
      %p61 = scmp.eq.s32.totalorder %s21, 0
      %p62 = por %p60, %p61
      %p63 = scmp.ne.s32.totalorder %s55, %s57
      %p64 = scmp.eq.s32.totalorder %s26, 1
      %p65 = por %p63, %p64
      %p66 = scmp.ne.s32.totalorder %s57, %s58
      %p67 = scmp.eq.s32.totalorder %s26, 0
      %p68 = por %p66, %p67
      %p69 = scmp.ne.s32.totalorder %s57, %s58
      %p70 = scmp.eq.s32.totalorder %s27, 1
      %p71 = por %p69, %p70
      %p73 = scmp.ne.s32.totalorder %s58, %s72
      %p74 = scmp.eq.s32.totalorder %s27, 0
      %p75 = por %p73, %p74
      %s77 = sadd.s32 %s76, 1
      %p80 = scmp.eq.s32.totalorder %s21, 1
      %p81 = scmp.ne.s32.totalorder %s76, %s78
      %p82 = scmp.eq.s32.totalorder %s21, 0
      %p83 = por %p81, %p82
      %p84 = scmp.ne.s32.totalorder %s76, %s78
      %p85 = scmp.eq.s32.totalorder %s26, 1
      %p86 = por %p84, %p85
      %p87 = scmp.ne.s32.totalorder %s78, %s79
      %p88 = scmp.eq.s32.totalorder %s26, 0
      %p89 = por %p87, %p88
      %p90 = scmp.ne.s32.totalorder %s78, %s79
      %p91 = scmp.eq.s32.totalorder %s27, 1
      %p92 = por %p90, %p91
      %p94 = scmp.ne.s32.totalorder %s79, %s93
      %p95 = scmp.eq.s32.totalorder %s27, 0
      %p96 = por %p94, %p95
      %s98 = sadd.s32 %s97, 1
      %p101 = scmp.eq.s32.totalorder %s21, 1
      %p102 = scmp.ne.s32.totalorder %s97, %s99
      %p103 = scmp.eq.s32.totalorder %s21, 0
      %p104 = por %p102, %p103
      %p105 = scmp.ne.s32.totalorder %s97, %s99
      %p106 = scmp.eq.s32.totalorder %s26, 1
      %p107 = por %p105, %p106
      %p108 = scmp.ne.s32.totalorder %s99, %s100
      %p109 = scmp.eq.s32.totalorder %s26, 0
      %p110 = por %p108, %p109
      %p111 = scmp.ne.s32.totalorder %s99, %s100
      %p112 = scmp.eq.s32.totalorder %s27, 1
      %p113 = por %p111, %p112
      %p115 = scmp.ne.s32.totalorder %s100, %s114
      %p116 = scmp.eq.s32.totalorder %s27, 0
      %p117 = por %p115, %p116
      %s119 = sadd.s32 %s118, 1
      %p122 = scmp.eq.s32.totalorder %s21, 1
      %p123 = scmp.ne.s32.totalorder %s118, %s120
      %p124 = scmp.eq.s32.totalorder %s21, 0
      %p125 = por %p123, %p124
      %p126 = scmp.ne.s32.totalorder %s118, %s120
      %p127 = scmp.eq.s32.totalorder %s26, 1
      %p128 = por %p126, %p127
      %p129 = scmp.ne.s32.totalorder %s120, %s121
      %p130 = scmp.eq.s32.totalorder %s26, 0
      %p131 = por %p129, %p130
      %p132 = scmp.ne.s32.totalorder %s120, %s121
      %p133 = scmp.eq.s32.totalorder %s27, 1
      %p134 = por %p132, %p133
      %p136 = scmp.ne.s32.totalorder %s121, %s135
      %p137 = scmp.eq.s32.totalorder %s27, 0
      %p138 = por %p136, %p137
      %s140 = sadd.s32 %s139, 1
      %p143 = scmp.eq.s32.totalorder %s21, 1
      %p144 = scmp.ne.s32.totalorder %s139, %s141
      %p145 = scmp.eq.s32.totalorder %s21, 0
      %p146 = por %p144, %p145
      %p147 = scmp.ne.s32.totalorder %s139, %s141
      %p148 = scmp.eq.s32.totalorder %s26, 1
      %p149 = por %p147, %p148
      %p150 = scmp.ne.s32.totalorder %s141, %s142
      %p151 = scmp.eq.s32.totalorder %s26, 0
      %p152 = por %p150, %p151
      %p153 = scmp.ne.s32.totalorder %s141, %s142
      %p154 = scmp.eq.s32.totalorder %s27, 1
      %p155 = por %p153, %p154
      %p157 = scmp.ne.s32.totalorder %s142, %s156
      %p158 = scmp.eq.s32.totalorder %s27, 0
      %p159 = por %p157, %p158
      %s161 = sadd.s32 %s160, 1
      %p164 = scmp.eq.s32.totalorder %s21, 1
      %p165 = scmp.ne.s32.totalorder %s160, %s162
      %p166 = scmp.eq.s32.totalorder %s21, 0
      %p167 = por %p165, %p166
      %p168 = scmp.ne.s32.totalorder %s160, %s162
      %p169 = scmp.eq.s32.totalorder %s26, 1
      %p170 = por %p168, %p169
      %p171 = scmp.ne.s32.totalorder %s162, %s163
      %p172 = scmp.eq.s32.totalorder %s26, 0
      %p173 = por %p171, %p172
      %p174 = scmp.ne.s32.totalorder %s162, %s163
      %p175 = scmp.eq.s32.totalorder %s27, 1
      %p176 = por %p174, %p175
      %p178 = scmp.ne.s32.totalorder %s163, %s177
      %p179 = scmp.eq.s32.totalorder %s27, 0
      %p180 = por %p178, %p179
      %s181 = ssub.s32 %s21, %s28
      %p182 = scmp.eq.s32.totalorder %s181, 0
      %s184 = sadd.s32 %s183, 1
      %s185 = scalar_select %p182, %s183, %s184
      %p188 = pneg %p182
      %p189 = scmp.eq.s32.totalorder %s21, 1
      %p190 = por %p188, %p189
      %p191 = scmp.ne.s32.totalorder %s183, %s186
      %p192 = scmp.eq.s32.totalorder %s21, 0
      %p193 = por %p191, %p192
      %p194 = scmp.ne.s32.totalorder %s183, %s186
      %p195 = scmp.eq.s32.totalorder %s26, 1
      %p196 = por %p194, %p195
      %p197 = scmp.ne.s32.totalorder %s186, %s187
      %p198 = scmp.eq.s32.totalorder %s26, 0
      %p199 = por %p197, %p198
      %p200 = scmp.ne.s32.totalorder %s186, %s187
      %p201 = scmp.eq.s32.totalorder %s27, 1
      %p202 = por %p200, %p201
      %p204 = scmp.ne.s32.totalorder %s187, %s203
      %p205 = scmp.eq.s32.totalorder %s27, 0
      %p206 = por %p204, %p205
      %p207 = scmp.le.s32.totalorder 1, %s21
      %p208 = scmp.lt.s32.totalorder %s21, 3
      %p209 = pnand %p207, %p208
      %p210 = pneg %p209
      // Predicated region
      $region9: #{tpu_custom_call.1} parent=5 // pred_check
        _
      $region10: #{tpu_custom_call.1} parent=5 // pred_check_branch
        %212 = sbr.rel (%p209) target = $region12
      $region11: #{tpu_custom_call.1} parent=5 // pred_region
        %s213 = ssub.s32 %s21, 1
        // Predicated region
        $region13: #{tpu_custom_call.1} parent=11 // pred_check
          %p214 = pneg %p68
        $region14: #{tpu_custom_call.1} parent=11 // pred_check_branch
          %216 = sbr.rel (%p214) target = $region16
        $region15: #{tpu_custom_call.1} parent=11 // pred_region
          %218 = vsyncadd [#allocation6], 0
          %s219 = sshll.u32 %s1, 4
          %s220 = int_to_ptr.hbm [resolvable:$true] %s219
          %s221 = sshll.u32 [#allocation5], 4
          %s222 = int_to_ptr.vmem [resolvable:$true] %s221
          %227 = dma.hbm_to_vmem [thread:$0]  %s220, 2048, %s222, [#allocation6], 128, 128, 8
        $region16: #{tpu_custom_call.1} parent=11 // pred_fallthru
          _
        // Predicated region
        $region17: #{tpu_custom_call.1} parent=11 // pred_check
          %p228 = pneg %p89
        $region18: #{tpu_custom_call.1} parent=11 // pred_check_branch
          %230 = sbr.rel (%p228) target = $region20
        $region19: #{tpu_custom_call.1} parent=11 // pred_region
          _
        $region20: #{tpu_custom_call.1} parent=11 // pred_fallthru
          _
        // Predicated region
        $region21: #{tpu_custom_call.1} parent=11 // pred_check
          %p231 = pneg %p110
        $region22: #{tpu_custom_call.1} parent=11 // pred_check_branch
          %233 = sbr.rel (%p231) target = $region24
        $region23: #{tpu_custom_call.1} parent=11 // pred_region
          %235 = vsyncadd [#allocation6], 0
          %s236 = sshll.u32 %s3, 4
          %s237 = int_to_ptr.hbm [resolvable:$true] %s236
          %s238 = sshll.u32 [#allocation7], 4
          %s239 = int_to_ptr.vmem [resolvable:$true] %s238
          %244 = dma.hbm_to_vmem [thread:$0]  %s237, 2048, %s239, [#allocation6], 128, 128, 8
        $region24: #{tpu_custom_call.1} parent=11 // pred_fallthru
          _
        // Predicated region
        $region25: #{tpu_custom_call.1} parent=11 // pred_check
          %p245 = pneg %p131
        $region26: #{tpu_custom_call.1} parent=11 // pred_check_branch
          %247 = sbr.rel (%p245) target = $region28
        $region27: #{tpu_custom_call.1} parent=11 // pred_region
          _
        $region28: #{tpu_custom_call.1} parent=11 // pred_fallthru
          _
        // Predicated region
        $region29: #{tpu_custom_call.1} parent=11 // pred_check
          %p248 = pneg %p152
        $region30: #{tpu_custom_call.1} parent=11 // pred_check_branch
          %250 = sbr.rel (%p248) target = $region32
        $region31: #{tpu_custom_call.1} parent=11 // pred_region
          %252 = vsyncadd [#allocation9], 0
          %s253 = sshll.u32 %s5, 4
          %s254 = int_to_ptr.hbm [resolvable:$true] %s253
          %s255 = sshll.u32 [#allocation8], 4
          %s256 = int_to_ptr.vmem [resolvable:$true] %s255
          %261 = dma.hbm_to_vmem [thread:$0]  %s254, 2048, %s256, [#allocation9], 128, 128, 8
        $region32: #{tpu_custom_call.1} parent=11 // pred_fallthru
          _
        // Predicated region
        $region33: #{tpu_custom_call.1} parent=11 // pred_check
          %p262 = pneg %p173
        $region34: #{tpu_custom_call.1} parent=11 // pred_check_branch
          %264 = sbr.rel (%p262) target = $region36
        $region35: #{tpu_custom_call.1} parent=11 // pred_region
          _
        $region36: #{tpu_custom_call.1} parent=11 // pred_fallthru
          _
      $region12: #{tpu_custom_call.1} parent=5 // pred_fallthru
        _
      %p265 = scmp.lt.s32.totalorder %s21, 2
      // Predicated region
      $region37: #{tpu_custom_call.1} parent=5 // pred_check
        %p266 = pneg %p265
      $region38: #{tpu_custom_call.1} parent=5 // pred_check_branch
        %268 = sbr.rel (%p266) target = $region40
      $region39: #{tpu_custom_call.1} parent=5 // pred_region
        // Predicated region
        $region41: #{tpu_custom_call.1} parent=39 // pred_check
          %p269 = pneg %p41
        $region42: #{tpu_custom_call.1} parent=39 // pred_check_branch
          %271 = sbr.rel (%p269) target = $region44
        $region43: #{tpu_custom_call.1} parent=39 // pred_region
          %s272 = sand.u32 %s31, 1
          %s273 = scalar_lea.sflag [#allocation3], %s272
          %s274 = sand.u32 %s31, 1
          %s275 = smul.addr %s274, 8
          %s276 = scalar_lea.vmem [#allocation2], %s275
          %278 = vsyncadd %s273, 0
          %s279 = smul.addr %s21, 8
          %s280 = scalar_lea.hbm %s0, %s279
          %s282 = sshll.u32 %s280, 4
          %s283 = int_to_ptr.hbm [resolvable:$true] %s282
          %s284 = sshll.u32 %s276, 4
          %s285 = int_to_ptr.vmem [resolvable:$true] %s284
          %287 = dma.hbm_to_vmem [thread:$0]  %s283, 128, %s285, %s273
        $region44: #{tpu_custom_call.1} parent=39 // pred_fallthru
          _
      $region40: #{tpu_custom_call.1} parent=5 // pred_fallthru
        _
      %p288 = scmp.le.s32.totalorder 1, %s21
      %p289 = scmp.lt.s32.totalorder %s21, 3
      %p290 = pnand %p288, %p289
      %p291 = pneg %p290
      // Predicated region
      $region45: #{tpu_custom_call.1} parent=5 // pred_check
        _
      $region46: #{tpu_custom_call.1} parent=5 // pred_check_branch
        %293 = sbr.rel (%p290) target = $region48
      $region47: #{tpu_custom_call.1} parent=5 // pred_region
        %s294 = ssub.s32 %s21, 1
        %s295 = sand.u32 %s34, 1
        %s296 = scalar_lea.sflag [#allocation3], %s295
        %s297 = sand.u32 %s34, 1
        %s298 = smul.addr %s297, 8
        %s299 = scalar_lea.vmem [#allocation2], %s298
        // Predicated region
        $region49: #{tpu_custom_call.1} parent=47 // pred_check
          %p300 = pneg %p47
        $region50: #{tpu_custom_call.1} parent=47 // pred_check_branch
          %302 = sbr.rel (%p300) target = $region52
        $region51: #{tpu_custom_call.1} parent=47 // pred_region
          %304 = dma.done %s296, 128
        $region52: #{tpu_custom_call.1} parent=47 // pred_fallthru
          _
        // Predicated region
        $region53: #{tpu_custom_call.1} parent=47 // pred_check
          %p305 = pneg %p68
        $region54: #{tpu_custom_call.1} parent=47 // pred_check_branch
          %307 = sbr.rel (%p305) target = $region56
        $region55: #{tpu_custom_call.1} parent=47 // pred_region
          %309 = dma.done [#allocation6], 2048
        $region56: #{tpu_custom_call.1} parent=47 // pred_fallthru
          _
        // Predicated region
        $region57: #{tpu_custom_call.1} parent=47 // pred_check
          %p310 = pneg %p110
        $region58: #{tpu_custom_call.1} parent=47 // pred_check_branch
          %312 = sbr.rel (%p310) target = $region60
        $region59: #{tpu_custom_call.1} parent=47 // pred_region
          %314 = dma.done [#allocation6], 2048
        $region60: #{tpu_custom_call.1} parent=47 // pred_fallthru
          _
        // Predicated region
        $region61: #{tpu_custom_call.1} parent=47 // pred_check
          %p315 = pneg %p152
        $region62: #{tpu_custom_call.1} parent=47 // pred_check_branch
          %317 = sbr.rel (%p315) target = $region64
        $region63: #{tpu_custom_call.1} parent=47 // pred_region
          %319 = dma.done [#allocation9], 2048
        $region64: #{tpu_custom_call.1} parent=47 // pred_fallthru
          _
        %s320 = sand.u32 %s34, 1
        %s321 = scalar_lea.sflag [#allocation3], %s320
        %s322 = sand.u32 %s34, 1
        %s323 = smul.addr %s322, 8
        %s324 = scalar_lea.vmem [#allocation2], %s323
        %p325 = pneg %p47
        %p326 = pneg %p44
        %p327 = pneg %p68
        %p328 = pneg %p65
        %p329 = pneg %p89
        %p330 = pneg %p86
        %p331 = pneg %p110
        %p332 = pneg %p107
        %p333 = pneg %p131
        %p334 = pneg %p128
        %p335 = pneg %p152
        %p336 = pneg %p149
        %p337 = pneg %p173
        %p338 = pneg %p170
        %p339 = pneg %p199
        %p340 = pneg %p196
        %s341 = sand.u32 %s186, 1
        %s342 = scalar_lea.sflag [#allocation4], %s341
        %s343 = sand.u32 %s186, 1
        %s344 = smul.addr %s343, 8
        %s345 = scalar_lea.vmem [#allocation10], %s344
        %v346 = vld [vmem:[%s299] sm:$0xff]
        %v347 = vld [vmem:[#allocation5] sm:$0xff]
        %v348 = vld [vmem:[#allocation5 + $0x8] sm:$0xff]
        %v349 = vld [vmem:[#allocation5 + $0x10] sm:$0xff]
        %v350 = vld [vmem:[#allocation5 + $0x18] sm:$0xff]
        %v351 = vld [vmem:[#allocation5 + $0x20] sm:$0xff]
        %v352 = vld [vmem:[#allocation5 + $0x28] sm:$0xff]
        %v353 = vld [vmem:[#allocation5 + $0x30] sm:$0xff]
        %v354 = vld [vmem:[#allocation5 + $0x38] sm:$0xff]
        %v355 = vld [vmem:[#allocation5 + $0x40] sm:$0xff]
        %v356 = vld [vmem:[#allocation5 + $0x48] sm:$0xff]
        %v357 = vld [vmem:[#allocation5 + $0x50] sm:$0xff]
        %v358 = vld [vmem:[#allocation5 + $0x58] sm:$0xff]
        %v359 = vld [vmem:[#allocation5 + $0x60] sm:$0xff]
        %v360 = vld [vmem:[#allocation5 + $0x68] sm:$0xff]
        %v361 = vld [vmem:[#allocation5 + $0x70] sm:$0xff]
        %v362 = vld [vmem:[#allocation5 + $0x78] sm:$0xff]
        %v363 = vld [vmem:[%s2] sm:$0x1]
        %v365 = vperm.slane %v363, 0
        %367 = vmatpush.msra.mxu0 %v362
        %368 = vmatpush.msra.mxu0 %v361
        %369 = vmatpush.msra.mxu0 %v360
        %370 = vmatpush.msra.mxu0 %v359
        %371 = vmatpush.msra.mxu0 %v358
        %372 = vmatpush.msra.mxu0 %v357
        %373 = vmatpush.msra.mxu0 %v356
        %374 = vmatpush.msra.mxu0 %v355
        %375 = vmatpush.msra.mxu0 %v354
        %376 = vmatpush.msra.mxu0 %v353
        %377 = vmatpush.msra.mxu0 %v352
        %378 = vmatpush.msra.mxu0 %v351
        %379 = vmatpush.msra.mxu0 %v350
        %380 = vmatpush.msra.mxu0 %v349
        %381 = vmatpush.msra.mxu0 %v348
        %382 = vmatpush.msra.mxu0 %v347
        %383 = vmatmul.f32.gmra.mxu0 %v346
        %v384 = vpop.f32.mrf.mxu0
        %v385 = vadd.f32 %v365, %v384
        %386 = vdwg.mxu0
        %v387 = vmax.f32 %v385, 0.0
        %v388 = vld [vmem:[#allocation7] sm:$0xff]
        %v389 = vld [vmem:[#allocation7 + $0x8] sm:$0xff]
        %v390 = vld [vmem:[#allocation7 + $0x10] sm:$0xff]
        %v391 = vld [vmem:[#allocation7 + $0x18] sm:$0xff]
        %v392 = vld [vmem:[#allocation7 + $0x20] sm:$0xff]
        %v393 = vld [vmem:[#allocation7 + $0x28] sm:$0xff]
        %v394 = vld [vmem:[#allocation7 + $0x30] sm:$0xff]
        %v395 = vld [vmem:[#allocation7 + $0x38] sm:$0xff]
        %v396 = vld [vmem:[#allocation7 + $0x40] sm:$0xff]
        %v397 = vld [vmem:[#allocation7 + $0x48] sm:$0xff]
        %v398 = vld [vmem:[#allocation7 + $0x50] sm:$0xff]
        %v399 = vld [vmem:[#allocation7 + $0x58] sm:$0xff]
        %v400 = vld [vmem:[#allocation7 + $0x60] sm:$0xff]
        %v401 = vld [vmem:[#allocation7 + $0x68] sm:$0xff]
        %v402 = vld [vmem:[#allocation7 + $0x70] sm:$0xff]
        %v403 = vld [vmem:[#allocation7 + $0x78] sm:$0xff]
        %v404 = vld [vmem:[%s4] sm:$0x1]
        %v406 = vperm.slane %v404, 0
        %408 = vmatpush.msra.mxu0 %v403
        %409 = vmatpush.msra.mxu0 %v402
        %410 = vmatpush.msra.mxu0 %v401
        %411 = vmatpush.msra.mxu0 %v400
        %412 = vmatpush.msra.mxu0 %v399
        %413 = vmatpush.msra.mxu0 %v398
        %414 = vmatpush.msra.mxu0 %v397
        %415 = vmatpush.msra.mxu0 %v396
        %416 = vmatpush.msra.mxu0 %v395
        %417 = vmatpush.msra.mxu0 %v394
        %418 = vmatpush.msra.mxu0 %v393
        %419 = vmatpush.msra.mxu0 %v392
        %420 = vmatpush.msra.mxu0 %v391
        %421 = vmatpush.msra.mxu0 %v390
        %422 = vmatpush.msra.mxu0 %v389
        %423 = vmatpush.msra.mxu0 %v388
        %424 = vmatmul.f32.gmra.mxu0 %v387
        %v425 = vpop.f32.mrf.mxu0
        %v426 = vadd.f32 %v406, %v425
        %427 = vdwg.mxu0
        %v428 = vmax.f32 %v426, 0.0
        %v429 = vld [vmem:[#allocation8] sm:$0xff]
        %v430 = vld [vmem:[#allocation8 + $0x8] sm:$0xff]
        %v431 = vld [vmem:[#allocation8 + $0x10] sm:$0xff]
        %v432 = vld [vmem:[#allocation8 + $0x18] sm:$0xff]
        %v433 = vld [vmem:[#allocation8 + $0x20] sm:$0xff]
        %v434 = vld [vmem:[#allocation8 + $0x28] sm:$0xff]
        %v435 = vld [vmem:[#allocation8 + $0x30] sm:$0xff]
        %v436 = vld [vmem:[#allocation8 + $0x38] sm:$0xff]
        %v437 = vld [vmem:[#allocation8 + $0x40] sm:$0xff]
        %v438 = vld [vmem:[#allocation8 + $0x48] sm:$0xff]
        %v439 = vld [vmem:[#allocation8 + $0x50] sm:$0xff]
        %v440 = vld [vmem:[#allocation8 + $0x58] sm:$0xff]
        %v441 = vld [vmem:[#allocation8 + $0x60] sm:$0xff]
        %v442 = vld [vmem:[#allocation8 + $0x68] sm:$0xff]
        %v443 = vld [vmem:[#allocation8 + $0x70] sm:$0xff]
        %v444 = vld [vmem:[#allocation8 + $0x78] sm:$0xff]
        %v445 = vld [vmem:[%s6] sm:$0x1]
        %v447 = vperm.slane %v445, 0
        %449 = vmatpush.msra.mxu0 %v444
        %450 = vmatpush.msra.mxu0 %v443
        %451 = vmatpush.msra.mxu0 %v442
        %452 = vmatpush.msra.mxu0 %v441
        %453 = vmatpush.msra.mxu0 %v440
        %454 = vmatpush.msra.mxu0 %v439
        %455 = vmatpush.msra.mxu0 %v438
        %456 = vmatpush.msra.mxu0 %v437
        %457 = vmatpush.msra.mxu0 %v436
        %458 = vmatpush.msra.mxu0 %v435
        %459 = vmatpush.msra.mxu0 %v434
        %460 = vmatpush.msra.mxu0 %v433
        %461 = vmatpush.msra.mxu0 %v432
        %462 = vmatpush.msra.mxu0 %v431
        %463 = vmatpush.msra.mxu0 %v430
        %464 = vmatpush.msra.mxu0 %v429
        %465 = vmatmul.f32.gmra.mxu0 %v428
        %v466 = vpop.f32.mrf.mxu0
        %v467 = vadd.f32 %v447, %v466
        %468 = vdwg.mxu0
        %469 = vmax.xlane.f32.xlu0 %v467
        %v470 = vpop.xlane.xlu0 %469
        %v471 = vsub.f32 %v467, %v470
        %v472 = vmul.f32 %v471, 1.442695
        %v473 = vpow.pop %v472
        %v474 = vlaneseq
        %v475 = vand.u32 %v474, 127
        %vm476 = vcmp.lt.s32.totalorder %v475, 8
        %v477 = vsel %vm476, 1, 0
        %vm478 = vcmp.eq.s32.totalorder %v477, 1
        %v479 = vsel %vm478, %v473, 0.0
        %480 = vadd.xlane.f32.xlu0 %v479
        %v481 = vpop.xlane.xlu0 %480
        %v482 = vrcp.pop %v481
        %v483 = vmul.f32 %v481, %v482
        %v484 = vsub.f32 1.0, %v483
        %v485 = vmul.f32 %v482, %v484
        %v486 = vadd.f32 %v482, %v485
        %vm487 = vweird.f32 %v481
        %vm488 = vweird.f32 %v482
        %vm489 = vmor %vm487, %vm488
        %v490 = vsel %vm489, %v482, %v486
        %v491 = vand.u32 2147483647, %v481
        %vm492 = vcmp.eq.f32.partialorder %v491, 8.507059e+37
        %v493 = vand.u32 %v481, 2147483648
        %v494 = vor.u32 1.1754944e-38, %v493
        %v495 = vsel %vm492, %v494, %v490
        %v496 = vmul.f32 1.0, %v495
        %v497 = vmul.f32 %v479, %v496
        %498 = vst [vmem:[%s345] sm:$0xff] %v497
        %s499 = sand.u32 %s186, 1
        %s500 = scalar_lea.sflag [#allocation4], %s499
        %s501 = sand.u32 %s186, 1
        %s502 = smul.addr %s501, 8
        %s503 = scalar_lea.vmem [#allocation10], %s502
        // Predicated region
        $region65: #{tpu_custom_call.1} parent=47 // pred_check
          %p504 = pneg %p196
        $region66: #{tpu_custom_call.1} parent=47 // pred_check_branch
          %506 = sbr.rel (%p504) target = $region68
        $region67: #{tpu_custom_call.1} parent=47 // pred_region
          %508 = vsyncadd %s500, 0
          %s509 = smul.addr %s26, 8
          %s510 = scalar_lea.hbm %s7, %s509
          %s512 = sshll.u32 %s503, 4
          %s513 = int_to_ptr.vmem [resolvable:$true] %s512
          %s514 = sshll.u32 %s510, 4
          %s515 = int_to_ptr.hbm [resolvable:$true] %s514
          %517 = dma.vmem_to_hbm [thread:$0]  %s513, 128, %s515, %s500
        $region68: #{tpu_custom_call.1} parent=47 // pred_fallthru
          _
      $region48: #{tpu_custom_call.1} parent=5 // pred_fallthru
        _
      %p518 = scmp.le.s32.totalorder 2, %s21
      // Predicated region
      $region69: #{tpu_custom_call.1} parent=5 // pred_check
        %p519 = pneg %p518
      $region70: #{tpu_custom_call.1} parent=5 // pred_check_branch
        %521 = sbr.rel (%p519) target = $region72
      $region71: #{tpu_custom_call.1} parent=5 // pred_region
        %s522 = ssub.s32 %s21, 2
        // Predicated region
        $region73: #{tpu_custom_call.1} parent=71 // pred_check
          %p523 = pneg %p202
        $region74: #{tpu_custom_call.1} parent=71 // pred_check_branch
          %525 = sbr.rel (%p523) target = $region76
        $region75: #{tpu_custom_call.1} parent=71 // pred_region
          %s526 = sand.u32 %s187, 1
          %s527 = scalar_lea.sflag [#allocation4], %s526
          %s528 = sand.u32 %s187, 1
          %s529 = smul.addr %s528, 8
          %s530 = scalar_lea.vmem [#allocation10], %s529
          %532 = dma.done %s527, 128
        $region76: #{tpu_custom_call.1} parent=71 // pred_fallthru
          _
      $region72: #{tpu_custom_call.1} parent=5 // pred_fallthru
        _
    $region6: #{tpu_custom_call.1} parent=1 // loop_footer
      %s25 = sadd.s32 1, %s21
    $region7: #{tpu_custom_call.1} parent=1 // loop_footer_branch
      %20 = sbr.rel target = $region3
    $region8: #{tpu_custom_call.1} parent=1 // loop_exit
      _
    %533 = vsyncpa [#allocation3], 1
    %s534 = scalar_lea.sflag [#allocation3], 1
    %535 = vsyncpa %s534, 1
    %536 = vsyncpa [#allocation6], 1
    %537 = vsyncpa [#allocation9], 1
    %538 = vsyncpa [#allocation4], 1
    %s539 = scalar_lea.sflag [#allocation4], 1
    %540 = vsyncpa %s539, 1

</llo_original>
